<compile_context>
chip_gen: v7x
topology: tpu7x:2x2x1
jax: 0.10.0
libtpu: 0.0.40
codegen_flags: <defaults>
</compile_context>

<pallas_src>
import functools

import jax
import jax.numpy as jnp
from jax.experimental import pallas as pl
from jax.experimental.pallas import tpu as pltpu

_VMEM_LIMIT_BYTES = 48 * 1024 * 1024   # explicit scoped-VMEM limit (all gens)
_BUF_BUDGET_BYTES = 4 * 1024 * 1024    # per pipeline buffer (in/out, x2 each)


# --------------------------------------------------------------------------- #
# Shared per-element / per-row math
# --------------------------------------------------------------------------- #
def _pow_term(xf, p):
    """Elementwise |x|**p in f32 without lax.pow (EUP exp/log for generic p)."""
    if p == 2.0:
        return xf * xf
    a = jnp.abs(xf)
    if p == 1.0:
        return a
    if p == 3.0:
        return a * a * a
    if p == 4.0:
        sq = a * a
        return sq * sq
    # Generic p: exp(p * log|x|); log(0) -> -inf -> exp -> 0, so zeros are safe.
    return jnp.exp(jnp.log(a) * jnp.float32(p))


def _inv_from_sum(s, p, eps):
    """1 / max(s**(1/p), eps) for s = sum(|x|**p) (shape (rows, 1) or (rows, L))."""
    if p == 2.0:
        # max(sqrt(s), eps) == sqrt(max(s, eps^2)); rsqrt runs on the EUP.
        return jax.lax.rsqrt(jnp.maximum(s, jnp.float32(eps * eps)))
    if p == 1.0:
        norm = s
    else:
        # s**(1/p) via exp/log (EUP); log(0) -> -inf -> exp -> 0 is the right limit.
        norm = jnp.exp(jnp.log(s) * jnp.float32(1.0 / p))
    return pl.reciprocal(jnp.maximum(norm, jnp.float32(eps)), approx=False)


# --------------------------------------------------------------------------- #
# Kernel 1: row-tiled path (D on lanes; lane-dense when D % 128 == 0)
# --------------------------------------------------------------------------- #
def _lp_norm_rows_kernel(x_ref, o_ref, *, p, eps, bf16_square_accum):
    # NOTE: a ragged tail block may contain garbage rows past the array end.
    # All math here is per-row, so NaN/Inf stays confined to those rows and the
    # clipped writeback of the standard blocked out_spec discards them. (This
    # assumption would not hold for element/manual-DMA output specs.)
    if p == 2.0 and bf16_square_accum and x_ref.dtype == jnp.bfloat16:
        # Optional low-precision variant: bf16 squares, f32 accumulation
        # (saves VALU upcasts when v7x is VALU-bound; ~0.2-0.4% norm error).
        xn = x_ref[...]
        s = jnp.sum(xn * xn, axis=-1, keepdims=True, dtype=jnp.float32)
    else:
        s = jnp.sum(_pow_term(x_ref[...].astype(jnp.float32), p),
                    axis=-1, keepdims=True)
    inv = _inv_from_sum(s, p, eps)
    x = x_ref[...]  # re-read for the scale: no full tile kept live across the reduce
    o_ref[...] = (x * inv.astype(x.dtype)).astype(o_ref.dtype)


# --------------------------------------------------------------------------- #
# Kernel 2: lane-packed path for small D (128 % D == 0).
# Each 128-lane row packs G = 128 // D logical rows; the per-logical-row
# reduction is a tiny block-diagonal 0/1 matmul (result is already broadcast
# back per lane). bf16x3 operand split keeps ~f32 accuracy on the MXU.
# --------------------------------------------------------------------------- #
def _bf16x3_dot(a_f32, seg_bf16):
    a1 = a_f32.astype(jnp.bfloat16)
    r1 = a_f32 - a1.astype(jnp.float32)
    a2 = r1.astype(jnp.bfloat16)
    a3 = (r1 - a2.astype(jnp.float32)).astype(jnp.bfloat16)
    acc = jnp.dot(a1, seg_bf16, preferred_element_type=jnp.float32)
    acc = acc + jnp.dot(a2, seg_bf16, preferred_element_type=jnp.float32)
    acc = acc + jnp.dot(a3, seg_bf16, preferred_element_type=jnp.float32)
    return acc


def _lp_norm_packed_kernel(seg_ref, x_ref, o_ref, *, p, eps):
    xf = x_ref[...].astype(jnp.float32)            # (block_rows, 128)
    s = _bf16x3_dot(_pow_term(xf, p), seg_ref[...])  # per-segment sums, per lane
    inv = _inv_from_sum(s, p, eps)                   # (block_rows, 128)
    x = x_ref[...]
    o_ref[...] = (x * inv.astype(x.dtype)).astype(o_ref.dtype)


# --------------------------------------------------------------------------- #
# Wrappers
# --------------------------------------------------------------------------- #
def _pick_block_rows(n_rows: int, width: int, itemsize: int) -> int:
    """Largest sensible row tile for an HBM-bandwidth-bound streaming kernel."""
    sub = 8 * max(1, 4 // max(1, itemsize))          # 8 f32 / 16 bf16 / 32 int8
    br = (_BUF_BUDGET_BYTES // max(1, width * itemsize)) // sub * sub
    br = max(sub, br)
    n_ceil = -(-n_rows // sub) * sub
    return max(sub, min(br, n_ceil))


def _compiler_params():
    return pltpu.CompilerParams(
        dimension_semantics=("parallel",),
        vmem_limit_bytes=_VMEM_LIMIT_BYTES)


def _call_rows(x2d, p, eps, bf16_square_accum):
    n, d = x2d.shape
    itemsize = jnp.dtype(x2d.dtype).itemsize
    br = _pick_block_rows(n, d, itemsize)
    kernel = functools.partial(
        _lp_norm_rows_kernel, p=float(p), eps=float(eps),
        bf16_square_accum=bool(bf16_square_accum))
    return pl.pallas_call(
        kernel,
        out_shape=jax.ShapeDtypeStruct((n, d), x2d.dtype),
        grid_spec=pltpu.PrefetchScalarGridSpec(
            num_scalar_prefetch=0,
            grid=(pl.cdiv(n, br),),
            in_specs=[pl.BlockSpec((br, d), lambda i: (i, 0))],
            out_specs=pl.BlockSpec((br, d), lambda i: (i, 0)),
        ),
        compiler_params=_compiler_params(),
        cost_estimate=pl.CostEstimate(
            flops=3 * n * d, transcendentals=2 * n,
            bytes_accessed=2 * n * d * itemsize),
    )(x2d)


def _call_packed(x2d, p, eps):
    n, d = x2d.shape
    g = 128 // d
    lanes = g * d                                   # == 128
    xp = x2d.reshape(n // g, lanes)                 # free contiguous reshape
    npk = xp.shape[0]
    itemsize = jnp.dtype(x2d.dtype).itemsize
    br = _pick_block_rows(npk, lanes, itemsize)

    # Block-diagonal 0/1 matrix: seg[i, j] = 1 iff lanes i and j belong to the
    # same packed logical row. Exactly representable in bf16.
    li = jnp.arange(lanes)[:, None] // d
    lj = jnp.arange(lanes)[None, :] // d
    seg = (li == lj).astype(jnp.bfloat16)

    kernel = functools.partial(_lp_norm_packed_kernel, p=float(p), eps=float(eps))
    out = pl.pallas_call(
        kernel,
        out_shape=jax.ShapeDtypeStruct((npk, lanes), x2d.dtype),
        grid_spec=pltpu.PrefetchScalarGridSpec(
            num_scalar_prefetch=0,
            grid=(pl.cdiv(npk, br),),
            in_specs=[pl.BlockSpec((lanes, lanes), lambda i: (0, 0)),
                      pl.BlockSpec((br, lanes), lambda i: (i, 0))],
            out_specs=pl.BlockSpec((br, lanes), lambda i: (i, 0)),
        ),
        compiler_params=_compiler_params(),
        cost_estimate=pl.CostEstimate(
            flops=3 * n * d + 6 * npk * lanes * lanes,
            transcendentals=2 * npk * lanes,
            bytes_accessed=2 * n * d * itemsize + lanes * lanes * 2),
    )(seg, xp)
    return out.reshape(n, d)


def lp_normalize(x: jax.Array, p: float = 2.0, eps: float = 1e-12,
                 bf16_square_accum: bool = False) -> jax.Array:
    """Equivalent of torch.nn.functional.normalize(x, p=p, dim=-1, eps=eps)."""
    orig_shape = x.shape
    d = orig_shape[-1]
    x2d = x.reshape(-1, d)
    n = x2d.shape[0]

    if d % 128 == 0:
        out = _call_rows(x2d, p, eps, bf16_square_accum)        # lane-dense
    elif d < 128 and 128 % d == 0 and n % (128 // d) == 0:
        out = _call_packed(x2d, p, eps)                          # packed lane-dense
    else:
        # Lane-sparse fallback (D not a 128-multiple, not packable): correct,
        # but only D/round_up(D,128) lane utilization.
        out = _call_rows(x2d, p, eps, bf16_square_accum)
    return out.reshape(orig_shape)


# --------------------------------------------------------------------------- #
# Reference + demo
# --------------------------------------------------------------------------- #
def _reference(x, p=2.0, eps=1e-12):
    xf = x.astype(jnp.float32)
    norm = jnp.sum(jnp.abs(xf) ** p, axis=-1, keepdims=True) ** (1.0 / p)
    return (xf / jnp.maximum(norm, eps)).astype(x.dtype)


if __name__ == "__main__":
    key = jax.random.PRNGKey(0)
    k1, k2, k3 = jax.random.split(key, 3)

    # batch=2, seq=8, hidden=32  -> packed lane-dense path (4 rows / 128 lanes).
    x = jax.random.normal(k1, (2, 8, 32), dtype=jnp.float32)
    y = jax.block_until_ready(lp_normalize(x, p=2.0))
    assert y.shape == x.shape and y.dtype == x.dtype
    assert jnp.allclose(y, _reference(x, p=2.0), atol=1e-5, rtol=1e-5), \
        "p=2 packed path mismatch vs reference"

    # Row count not divisible by the packing factor -> full-D row path
    # (also exercises the un-masked ragged tail block).
    xr = jax.random.normal(k2, (5, 7, 32), dtype=jnp.float32)
    yr = jax.block_until_ready(lp_normalize(xr, p=2.0))
    assert jnp.allclose(yr, _reference(xr, p=2.0), atol=1e-5, rtol=1e-5), \
        "p=2 ragged row-path mismatch vs reference"

    # Lane-dense row path (D a multiple of 128), bf16 input.
    xb = jax.random.normal(k3, (2, 8, 256), dtype=jnp.bfloat16)
    yb = jax.block_until_ready(lp_normalize(xb, p=2.0))
    assert jnp.allclose(yb.astype(jnp.float32),
                        _reference(xb, p=2.0).astype(jnp.float32),
                        atol=2e-2, rtol=2e-2), "bf16 p=2 mismatch vs reference"

    # Non-default p (exact reciprocal now -> tight tolerances).
    y1 = jax.block_until_ready(lp_normalize(x, p=1.0))
    assert jnp.allclose(y1, _reference(x, p=1.0), atol=1e-5, rtol=1e-5), \
        "p=1 mismatch vs reference"
    y3 = jax.block_until_ready(lp_normalize(xr, p=3.0))
    assert jnp.allclose(y3, _reference(xr, p=3.0), atol=1e-4, rtol=1e-4), \
        "p=3 mismatch vs reference"

    print("KERNEL_OK")
</pallas_src>

<mosaic_0001>
module attributes {stable_mosaic.version = 11 : i64} {
  func.func @_lp_norm_packed_kernel(%arg0: i32, %arg1: memref<128x128xbf16, #tpu.memory_space<vmem>>, %arg2: memref<8x128xf32, #tpu.memory_space<vmem>>, %arg3: memref<8x128xf32, #tpu.memory_space<vmem>>) attributes {dimension_semantics = [#tpu.dimension_semantics<parallel>], iteration_bounds = array<i64: 1>, scalar_prefetch = 0 : i64, scratch_operands = 0 : i64, tpu.core_type = #tpu.core_type<tc>, window_params = [{pipeline_mode = #tpu.pipeline_mode<synchronous>, transform_indices = @transform_0, window_bounds = array<i64: 128, 128>}, {transform_indices = @transform_1, window_bounds = array<i64: 8, 128>}, {transform_indices = @transform_2, window_bounds = array<i64: 8, 128>}]} {
    %c0 = arith.constant 0 : index
    %c0_0 = arith.constant 0 : index
    %0 = vector.load %arg2[%c0, %c0_0] : memref<8x128xf32, #tpu.memory_space<vmem>>, vector<8x128xf32>
    %1 = arith.mulf %0, %0 : vector<8x128xf32>
    %c0_1 = arith.constant 0 : index
    %c0_2 = arith.constant 0 : index
    %2 = vector.load %arg1[%c0_1, %c0_2] : memref<128x128xbf16, #tpu.memory_space<vmem>>, vector<128x128xbf16>
    %3 = arith.truncf %1 : vector<8x128xf32> to vector<8x128xbf16>
    %4 = arith.extf %3 : vector<8x128xbf16> to vector<8x128xf32>
    %5 = arith.subf %1, %4 : vector<8x128xf32>
    %6 = arith.truncf %5 : vector<8x128xf32> to vector<8x128xbf16>
    %7 = arith.extf %6 : vector<8x128xbf16> to vector<8x128xf32>
    %8 = arith.subf %5, %7 : vector<8x128xf32>
    %9 = arith.truncf %8 : vector<8x128xf32> to vector<8x128xbf16>
    %cst = arith.constant dense<0.000000e+00> : vector<8x128xf32>
    %10 = tpu.matmul %3, %2, %cst {dimension_numbers = #tpu.dot_dimension_numbers<[1], [0], [0], [1], [0, 0, 1, 1], [], []>} : vector<8x128xbf16>, vector<128x128xbf16>, vector<8x128xf32> -> vector<8x128xf32>
    %cst_3 = arith.constant dense<0.000000e+00> : vector<8x128xf32>
    %11 = tpu.matmul %6, %2, %cst_3 {dimension_numbers = #tpu.dot_dimension_numbers<[1], [0], [0], [1], [0, 0, 1, 1], [], []>} : vector<8x128xbf16>, vector<128x128xbf16>, vector<8x128xf32> -> vector<8x128xf32>
    %12 = arith.addf %10, %11 : vector<8x128xf32>
    %cst_4 = arith.constant dense<0.000000e+00> : vector<8x128xf32>
    %13 = tpu.matmul %9, %2, %cst_4 {dimension_numbers = #tpu.dot_dimension_numbers<[1], [0], [0], [1], [0, 0, 1, 1], [], []>} : vector<8x128xbf16>, vector<128x128xbf16>, vector<8x128xf32> -> vector<8x128xf32>
    %14 = arith.addf %12, %13 : vector<8x128xf32>
    %cst_5 = arith.constant 1.000000e-24 : f32
    %15 = vector.broadcast %cst_5 : f32 to vector<8x128xf32>
    %16 = arith.maximumf %14, %15 : vector<8x128xf32>
    %17 = math.rsqrt %16 : vector<8x128xf32>
    %c0_6 = arith.constant 0 : index
    %c0_7 = arith.constant 0 : index
    %18 = vector.load %arg2[%c0_6, %c0_7] : memref<8x128xf32, #tpu.memory_space<vmem>>, vector<8x128xf32>
    %19 = arith.mulf %18, %17 : vector<8x128xf32>
    %c0_8 = arith.constant 0 : index
    %c0_9 = arith.constant 0 : index
    %20 = vector.load %arg3[%c0_8, %c0_9] : memref<8x128xf32, #tpu.memory_space<vmem>>, vector<8x128xf32>
    tpu.vector_store %arg3[%c0_8, %c0_9], %19 {strides = array<i32>} : memref<8x128xf32, #tpu.memory_space<vmem>>, vector<8x128xf32>,
    return
  }
  func.func @transform_0(%arg0: i32) -> (i32, i32) {
    %c0_i32 = arith.constant 0 : i32
    %c0_i32_0 = arith.constant 0 : i32
    %c0_i32_1 = arith.constant 0 : i32
    return %c0_i32, %c0_i32_0 : i32, i32
  }
  func.func @transform_1(%arg0: i32) -> (i32, i32) {
    %c0_i32 = arith.constant 0 : i32
    %c0_i32_0 = arith.constant 0 : i32
    return %arg0, %c0_i32 : i32, i32
  }
  func.func @transform_2(%arg0: i32) -> (i32, i32) {
    %c0_i32 = arith.constant 0 : i32
    %c0_i32_0 = arith.constant 0 : i32
    return %arg0, %c0_i32 : i32, i32
  }
}

</mosaic_0001>

<llo_original>
// kernel: tpu_custom_call.1
$region0: #{tpu_custom_call.1}
  #allocation0 [shape = 'u32[]', space=smem, size = 0x4, offset = 0x4, fixed_abs, tag = 'smem constant byte address 0x4 - core index']
  #allocation1 [shape = 'u32[144,128]{1,0:T(1,128)}', space=vmem, size = 0x12000, scoped, tag = 'internal scratch']
  %s0 = inlined_call_operand.hbm [shape: bf16[128,128], index: 0, kind: input, shape index: {}]
  %s1 = inlined_call_operand.hbm [shape: f32[4,128], index: 1, kind: input, shape index: {}]
  %s2 = inlined_call_operand.hbm [shape: f32[4,128], index: 2, kind: output, shape index: {}]
  %s3 = sld [smem:[#allocation0]]
  $region26: #{tpu_custom_call.1} parent=0
    _
  %s5 = ssub.s32 1, %s3
  %s6 = scalar_select 0, %s5, %s3
  $region1: #{tpu_custom_call.1} parent=0
    #allocation2 [shape = 'u8[32768]{0}', space=vmem, size = 0x8000, scoped, tag = 'input window, operand 0, single buffered']
    #allocation3 [shape = 's32[1]{0}', space=sflag, size = 0x4, scoped, tag = 'scoped memory for tpu_custom_call.1']
    #allocation4 [shape = 's32[1]{0}', space=sflag, size = 0x4, scoped, tag = 'scoped memory for tpu_custom_call.1']
    #allocation5 [shape = 'u8[4096]{0}', space=vmem, size = 0x1000, scoped, tag = 'input window, operand 1, single buffered']
    #allocation6 [shape = 's32[1]{0}', space=sflag, size = 0x4, scoped, tag = 'scoped memory for tpu_custom_call.1']
    #allocation7 [shape = 'u8[4096]{0}', space=vmem, size = 0x1000, scoped, tag = 'output window, operand 0, single buffered']
    %7 = vsyncpa [#allocation3], 0
    %8 = vsyncpa [#allocation6], 0
    %9 = vsyncpa [#allocation4], 0
    // Predicated region
    $region2: #{tpu_custom_call.1} parent=1 // pred_check
      _
    $region3: #{tpu_custom_call.1} parent=1 // pred_check_branch
      %11 = sbr.rel (0) target = $region5
    $region4: #{tpu_custom_call.1} parent=1 // pred_region
      %s13 = ssub.s32 1024, 1024
      %14 = vsyncadd [#allocation3], %s13
      %s15 = sshll.u32 [#allocation2], 4
      %s16 = int_to_ptr.vmem [resolvable:$true] %s15
      %21 = dma.hbm_to_vmem [thread:$0]  %s0, 1024, %s16, [#allocation3], 64, 64, 4
    $region5: #{tpu_custom_call.1} parent=1 // pred_fallthru
      _
    // Predicated region
    $region6: #{tpu_custom_call.1} parent=1 // pred_check
      _
    $region7: #{tpu_custom_call.1} parent=1 // pred_check_branch
      %23 = sbr.rel (0) target = $region9
    $region8: #{tpu_custom_call.1} parent=1 // pred_region
      %s25 = ssub.s32 128, 64
      %26 = vsyncadd [#allocation6], %s25
      %s27 = sshll.u32 [#allocation5], 4
      %s28 = int_to_ptr.vmem [resolvable:$true] %s27
      %33 = dma.hbm_to_vmem [thread:$0]  %s1, 64, %s28, [#allocation6], 64, 64, 4
    $region9: #{tpu_custom_call.1} parent=1 // pred_fallthru
      _
    // Predicated region
    $region10: #{tpu_custom_call.1} parent=1 // pred_check
      _
    $region11: #{tpu_custom_call.1} parent=1 // pred_check_branch
      %35 = sbr.rel (0) target = $region13
    $region12: #{tpu_custom_call.1} parent=1 // pred_region
      %36 = dma.done [#allocation3], 1024
    $region13: #{tpu_custom_call.1} parent=1 // pred_fallthru
      _
    // Predicated region
    $region14: #{tpu_custom_call.1} parent=1 // pred_check
      _
    $region15: #{tpu_custom_call.1} parent=1 // pred_check_branch
      %38 = sbr.rel (0) target = $region17
    $region16: #{tpu_custom_call.1} parent=1 // pred_region
      %39 = dma.done [#allocation6], 128
    $region17: #{tpu_custom_call.1} parent=1 // pred_fallthru
      _
    %v41 = vld [vmem:[#allocation5] sm:$0xff]
    %v42 = vmul.f32 %v41, %v41
    %v43 = vld [vmem:[#allocation2] sm:$0xf]
    %v44 = vld [vmem:[#allocation2 + $0x4] sm:$0xf]
    %v45 = vld [vmem:[#allocation2 + $0x8] sm:$0xf]
    %v46 = vld [vmem:[#allocation2 + $0xc] sm:$0xf]
    %v47 = vld [vmem:[#allocation2 + $0x10] sm:$0xf]
    %v48 = vld [vmem:[#allocation2 + $0x14] sm:$0xf]
    %v49 = vld [vmem:[#allocation2 + $0x18] sm:$0xf]
    %v50 = vld [vmem:[#allocation2 + $0x1c] sm:$0xf]
    %v51 = vld [vmem:[#allocation2 + $0x20] sm:$0xf]
    %v52 = vld [vmem:[#allocation2 + $0x24] sm:$0xf]
    %v53 = vld [vmem:[#allocation2 + $0x28] sm:$0xf]
    %v54 = vld [vmem:[#allocation2 + $0x2c] sm:$0xf]
    %v55 = vld [vmem:[#allocation2 + $0x30] sm:$0xf]
    %v56 = vld [vmem:[#allocation2 + $0x34] sm:$0xf]
    %v57 = vld [vmem:[#allocation2 + $0x38] sm:$0xf]
    %v58 = vld [vmem:[#allocation2 + $0x3c] sm:$0xf]
    %v59 = vpack.c.bf16 %v42, %v42
    %v60 = vunpack.c.l.bf16 %v59
    %v61 = vsub.f32 %v42, %v60
    %v62 = vpack.c.bf16 %v61, %v61
    %v63 = vunpack.c.l.bf16 %v62
    %v64 = vsub.f32 %v61, %v63
    %v65 = vpack.c.bf16 %v64, %v64
    %v82 = vunpack.c.l.b16 %v43
    %v83 = vunpack.c.l.b16 %v44
    %v84 = vunpack.c.l.b16 %v45
    %v85 = vunpack.c.l.b16 %v46
    %v86 = vunpack.c.l.b16 %v47
    %v87 = vunpack.c.l.b16 %v48
    %v88 = vunpack.c.l.b16 %v49
    %v89 = vunpack.c.l.b16 %v50
    %v90 = vunpack.c.l.b16 %v51
    %v91 = vunpack.c.l.b16 %v52
    %v92 = vunpack.c.l.b16 %v53
    %v93 = vunpack.c.l.b16 %v54
    %v94 = vunpack.c.l.b16 %v55
    %v95 = vunpack.c.l.b16 %v56
    %v96 = vunpack.c.l.b16 %v57
    %v97 = vunpack.c.l.b16 %v58
    %v98 = vpack.c.b16 %v83, %v82
    %v99 = vpack.c.b16 %v85, %v84
    %v100 = vpack.c.b16 %v87, %v86
    %v101 = vpack.c.b16 %v89, %v88
    %v102 = vpack.c.b16 %v91, %v90
    %v103 = vpack.c.b16 %v93, %v92
    %v104 = vpack.c.b16 %v95, %v94
    %v105 = vpack.c.b16 %v97, %v96
    %114 = vmatprep.subr.bf16.mxu0 0
    %115 = vmatpush1.bf16.msra.mxu0 %v98
    %116 = vmatprep.subr.bf16.mxu0 0
    %117 = vmatpush1.bf16.msra.mxu0 %v99
    %118 = vmatprep.subr.bf16.mxu0 0
    %119 = vmatpush1.bf16.msra.mxu0 %v100
    %120 = vmatprep.subr.bf16.mxu0 0
    %121 = vmatpush1.bf16.msra.mxu0 %v101
    %122 = vmatprep.subr.bf16.mxu0 0
    %123 = vmatpush1.bf16.msra.mxu0 %v102
    %124 = vmatprep.subr.bf16.mxu0 0
    %125 = vmatpush1.bf16.msra.mxu0 %v103
    %126 = vmatprep.subr.bf16.mxu0 0
    %127 = vmatpush1.bf16.msra.mxu0 %v104
    %128 = vmatprep.subr.bf16.mxu0 0
    %129 = vmatpush1.bf16.msra.mxu0 %v105
    %130 = vmatprep.subr.bf16.mxu0 0
    %131 = vmatpush1.bf16.msra.mxu0 0
    %132 = vmatprep.subr.bf16.mxu0 0
    %133 = vmatpush1.bf16.msra.mxu0 0
    %134 = vmatprep.subr.bf16.mxu0 0
    %135 = vmatpush1.bf16.msra.mxu0 0
    %136 = vmatprep.subr.bf16.mxu0 0
    %137 = vmatpush1.bf16.msra.mxu0 0
    %138 = vmatprep.subr.bf16.mxu0 0
    %139 = vmatpush1.bf16.msra.mxu0 0
    %140 = vmatprep.subr.bf16.mxu0 0
    %141 = vmatpush1.bf16.msra.mxu0 0
    %142 = vmatprep.subr.bf16.mxu0 0
    %143 = vmatpush1.bf16.msra.mxu0 0
    %144 = vmatprep.subr.bf16.mxu0 0
    %145 = vmatpush1.bf16.msra.mxu0 0
    %146 = vmatprep.mubr.bf16.mxu0 0
    %147 = vmatmul.mubr.bf16.gmra.mrb[0].mxu0 %v62
    %v148 = vpop.f32.mrb[0].mxu0
    %v149 = vadd.f32 0.0, %v148
    %v150 = vpop.f32.mrb[0].mxu0
    %v151 = vpop.f32.mrb[0].mxu0
    %v152 = vpop.f32.mrb[0].mxu0
    %153 = vdwg.mxu0
    %154 = vmatprep.subr.bf16.mxu0 0
    %155 = vmatpush1.bf16.msra.mxu0 %v98
    %156 = vmatprep.subr.bf16.mxu0 0
    %157 = vmatpush1.bf16.msra.mxu0 %v99
    %158 = vmatprep.subr.bf16.mxu0 0
    %159 = vmatpush1.bf16.msra.mxu0 %v100
    %160 = vmatprep.subr.bf16.mxu0 0
    %161 = vmatpush1.bf16.msra.mxu0 %v101
    %162 = vmatprep.subr.bf16.mxu0 0
    %163 = vmatpush1.bf16.msra.mxu0 %v102
    %164 = vmatprep.subr.bf16.mxu0 0
    %165 = vmatpush1.bf16.msra.mxu0 %v103
    %166 = vmatprep.subr.bf16.mxu0 0
    %167 = vmatpush1.bf16.msra.mxu0 %v104
    %168 = vmatprep.subr.bf16.mxu0 0
    %169 = vmatpush1.bf16.msra.mxu0 %v105
    %170 = vmatprep.subr.bf16.mxu0 0
    %171 = vmatpush1.bf16.msra.mxu0 0
    %172 = vmatprep.subr.bf16.mxu0 0
    %173 = vmatpush1.bf16.msra.mxu0 0
    %174 = vmatprep.subr.bf16.mxu0 0
    %175 = vmatpush1.bf16.msra.mxu0 0
    %176 = vmatprep.subr.bf16.mxu0 0
    %177 = vmatpush1.bf16.msra.mxu0 0
    %178 = vmatprep.subr.bf16.mxu0 0
    %179 = vmatpush1.bf16.msra.mxu0 0
    %180 = vmatprep.subr.bf16.mxu0 0
    %181 = vmatpush1.bf16.msra.mxu0 0
    %182 = vmatprep.subr.bf16.mxu0 0
    %183 = vmatpush1.bf16.msra.mxu0 0
    %184 = vmatprep.subr.bf16.mxu0 0
    %185 = vmatpush1.bf16.msra.mxu0 0
    %186 = vmatprep.mubr.bf16.mxu0 0
    %187 = vmatmul.mubr.bf16.gmra.mrb[0].mxu0 %v59
    %v188 = vpop.f32.mrb[0].mxu0
    %v189 = vadd.f32 %v149, %v188
    %v190 = vpop.f32.mrb[0].mxu0
    %v191 = vpop.f32.mrb[0].mxu0
    %v192 = vpop.f32.mrb[0].mxu0
    %193 = vdwg.mxu0
    %194 = vmatprep.subr.bf16.mxu0 0
    %195 = vmatpush1.bf16.msra.mxu0 %v98
    %196 = vmatprep.subr.bf16.mxu0 0
    %197 = vmatpush1.bf16.msra.mxu0 %v99
    %198 = vmatprep.subr.bf16.mxu0 0
    %199 = vmatpush1.bf16.msra.mxu0 %v100
    %200 = vmatprep.subr.bf16.mxu0 0
    %201 = vmatpush1.bf16.msra.mxu0 %v101
    %202 = vmatprep.subr.bf16.mxu0 0
    %203 = vmatpush1.bf16.msra.mxu0 %v102
    %204 = vmatprep.subr.bf16.mxu0 0
    %205 = vmatpush1.bf16.msra.mxu0 %v103
    %206 = vmatprep.subr.bf16.mxu0 0
    %207 = vmatpush1.bf16.msra.mxu0 %v104
    %208 = vmatprep.subr.bf16.mxu0 0
    %209 = vmatpush1.bf16.msra.mxu0 %v105
    %210 = vmatprep.subr.bf16.mxu0 0
    %211 = vmatpush1.bf16.msra.mxu0 0
    %212 = vmatprep.subr.bf16.mxu0 0
    %213 = vmatpush1.bf16.msra.mxu0 0
    %214 = vmatprep.subr.bf16.mxu0 0
    %215 = vmatpush1.bf16.msra.mxu0 0
    %216 = vmatprep.subr.bf16.mxu0 0
    %217 = vmatpush1.bf16.msra.mxu0 0
    %218 = vmatprep.subr.bf16.mxu0 0
    %219 = vmatpush1.bf16.msra.mxu0 0
    %220 = vmatprep.subr.bf16.mxu0 0
    %221 = vmatpush1.bf16.msra.mxu0 0
    %222 = vmatprep.subr.bf16.mxu0 0
    %223 = vmatpush1.bf16.msra.mxu0 0
    %224 = vmatprep.subr.bf16.mxu0 0
    %225 = vmatpush1.bf16.msra.mxu0 0
    %226 = vmatprep.mubr.bf16.mxu0 0
    %227 = vmatmul.mubr.bf16.gmra.mrb[0].mxu0 %v65
    %v228 = vpop.f32.mrb[0].mxu0
    %v229 = vadd.f32 0.0, %v228
    %v230 = vpop.f32.mrb[0].mxu0
    %v231 = vpop.f32.mrb[0].mxu0
    %v232 = vpop.f32.mrb[0].mxu0
    %233 = vdwg.mxu0
    %v234 = vadd.f32 %v189, %v229
    %v235 = vmax.f32 %v234, 1e-24
    %v236 = vrsqrt.pop %v235
    %v237 = vmul.f32 %v41, %v236
    %238 = vst [vmem:[#allocation7] sm:$0xff] %v237
    // Predicated region
    $region18: #{tpu_custom_call.1} parent=1 // pred_check
      _
    $region19: #{tpu_custom_call.1} parent=1 // pred_check_branch
      %240 = sbr.rel (0) target = $region21
    $region20: #{tpu_custom_call.1} parent=1 // pred_region
      %s242 = ssub.s32 128, 64
      %243 = vsyncadd [#allocation4], %s242
      %s244 = sshll.u32 [#allocation7], 4
      %s245 = int_to_ptr.vmem [resolvable:$true] %s244
      %250 = dma.vmem_to_hbm [thread:$0]  %s245, 64, %s2, [#allocation4], 64, 64, 4
    $region21: #{tpu_custom_call.1} parent=1 // pred_fallthru
      _
    // Predicated region
    $region22: #{tpu_custom_call.1} parent=1 // pred_check
      _
    $region23: #{tpu_custom_call.1} parent=1 // pred_check_branch
      %252 = sbr.rel (0) target = $region25
    $region24: #{tpu_custom_call.1} parent=1 // pred_region
      %253 = dma.done [#allocation4], 128
    $region25: #{tpu_custom_call.1} parent=1 // pred_fallthru
      _
    %254 = vsyncpa [#allocation3], 1
    %255 = vsyncpa [#allocation6], 1
    %256 = vsyncpa [#allocation4], 1

</llo_original>
